<compile_context>
chip_gen: v7x
topology: tpu7x:2x2x1
jax: 0.10.0
libtpu: 0.0.40
codegen_flags: <defaults>
</compile_context>

<pallas_src>
import math

import jax
import jax.numpy as jnp
from jax.experimental import pallas as pl
from jax.experimental.pallas import tpu as pltpu


_SQRT_2_OVER_PI = math.sqrt(2.0 / math.pi)


def _gelu(x):
    # matches reference gelu: 0.5 * x * (1 + tanh(sqrt(2/pi)*(x + 0.044715*x^3)))
    return 0.5 * x * (1.0 + jnp.tanh(_SQRT_2_OVER_PI * (x + 0.044715 * x * x * x)))


def _round_up(n, m):
    return ((n + m - 1) // m) * m


def _pad_axis_to(a, axis, target):
    cur = a.shape[axis]
    if cur == target:
        return a
    cfg = [(0, 0)] * a.ndim
    cfg[axis] = (0, target - cur)
    return jnp.pad(a, cfg)


def _choose_h_tile(H, Dp, itemsize, budget_bytes=8 * 1024 * 1024):
    """Largest 128-multiple divisor of H whose double-buffered W1/W2 slabs fit
    the budget; falls back to the full H (block == full dim is always legal)."""
    cands = [c for c in (2048, 1024, 512, 256, 128) if c <= H and H % c == 0]
    if not cands:
        return H
    for c in cands:
        if 2 * 2 * Dp * c * itemsize <= budget_bytes:
            return c
    return cands[-1]


def _selected_ffn_kernel(rows_ref, experts_ref,                  # scalar-prefetch (SMEM), unused here
                         x_ref, w1_ref, b1_ref, w2_ref, b2_ref,  # VMEM inputs
                         o_ref,                                  # VMEM output
                         acc_ref):                               # VMEM f32 scratch
    """Grid = (selected pair p, H-chunk hk).  index_maps already selected:
       x_ref  (1, Dp)  = token row x[b, j, :]   (lane padded)
       w1_ref (Dp, TH) = W1[e][:, hk*TH:(hk+1)*TH]     b1_ref (1, TH)
       w2_ref (TH, Dp) = W2[e][hk*TH:(hk+1)*TH, :]     b2_ref (1, Dp)
    The H axis is a reduction: accumulate into acc_ref, finalize on last chunk."""
    hk = pl.program_id(1)

    @pl.when(hk == 0)
    def _init():
        acc_ref[...] = jnp.zeros_like(acc_ref)

    # First matmul + bias + GELU, fused per H chunk (no (T, H) intermediate).
    h = jnp.dot(x_ref[...], w1_ref[...], preferred_element_type=jnp.float32)
    h = _gelu(h + b1_ref[...].astype(jnp.float32))                 # f32 GELU (v5e-safe)
    # Second matmul: accumulate this chunk's contribution in f32.
    acc_ref[...] += jnp.dot(h.astype(w2_ref.dtype), w2_ref[...],
                            preferred_element_type=jnp.float32)

    @pl.when(hk == pl.num_programs(1) - 1)
    def _finalize():
        o_ref[...] = (acc_ref[...] + b2_ref[...].astype(jnp.float32)).astype(o_ref.dtype)


def moe_selected_ffn(xp, rows, experts, W1p, b1, W2p, b2p):
    """Apply expert `experts[p]` to row `rows[p]` of xp, for every selected pair p.

    xp      : (T, 1, Dp)  lane-padded flattened tokens
    rows    : (P,) int32  token-row index into xp per selected (b, j) pair
    experts : (P,) int32  expert index per selected pair
    W1p     : (n_exp, Dp, H),  b1  : (n_exp, 1, H)
    W2p     : (n_exp, H, Dp),  b2p : (n_exp, 1, Dp)
    returns : (P, 1, Dp)
    """
    n_exp, Dp, H = W1p.shape
    P = rows.shape[0]
    itemsize = jnp.dtype(xp.dtype).itemsize
    th = _choose_h_tile(H, Dp, itemsize)
    n_hk = H // th

    # Rough double-buffered footprint (+ f32 accumulator), with headroom;
    # clamp well under the v7x 64 MiB physical VMEM.
    tile_elems = Dp + Dp * th + th + th * Dp + Dp + Dp
    vmem_limit = int(min(max(4 * tile_elems * itemsize, 4 * 1024 * 1024),
                         48 * 1024 * 1024))

    grid_spec = pltpu.PrefetchScalarGridSpec(
        num_scalar_prefetch=2,
        grid=(P, n_hk),                                   # reduction (H) last
        in_specs=[
            # token row, gathered via the prefetched row table
            pl.BlockSpec((None, 1, Dp), lambda p, hk, rows, exps: (rows[p], 0, 0)),
            # per-expert weight slabs, picked via the prefetched expert table
            pl.BlockSpec((None, Dp, th), lambda p, hk, rows, exps: (exps[p], 0, hk)),
            pl.BlockSpec((None, 1, th),  lambda p, hk, rows, exps: (exps[p], 0, hk)),
            pl.BlockSpec((None, th, Dp), lambda p, hk, rows, exps: (exps[p], hk, 0)),
            pl.BlockSpec((None, 1, Dp),  lambda p, hk, rows, exps: (exps[p], 0, 0)),
        ],
        out_specs=pl.BlockSpec((None, 1, Dp), lambda p, hk, rows, exps: (p, 0, 0)),
        scratch_shapes=[pltpu.VMEM((1, Dp), jnp.float32)],
    )
    # TODO(synk): if per-step weight DMA is exposed at large D, bump the weight
    # BlockSpecs to pipeline_mode=pl.Buffered(3) within the VMEM budget.
    return pl.pallas_call(
        _selected_ffn_kernel,
        out_shape=jax.ShapeDtypeStruct((P, 1, Dp), xp.dtype),
        grid_spec=grid_spec,
        compiler_params=pltpu.CompilerParams(
            dimension_semantics=("parallel", "arbitrary"),
            vmem_limit_bytes=vmem_limit),
    )(rows, experts, xp, W1p, b1, W2p, b2p)


def ffn_experts_forward(x, params, k):
    """Exact re-implementation of FFN_Experts.forward."""
    B, N, D = x.shape
    W1, b1, W2, b2, Wr, br = params
    assert k <= N, "reference gather semantics require k <= seq length"

    # ---- routing (TopKRoute): tiny linear + mean + softmax, plain JAX --------
    scores = jnp.einsum("bnd,de->bne", x, Wr) + br           # (B, N, n_exp)
    scores = jax.nn.softmax(scores.mean(axis=1), axis=-1)    # (B, n_exp)
    # TODO(synk): top-k has no clean Pallas equivalent; kept in lax.top_k.
    vals, idx = jax.lax.top_k(scores, k)                     # (B, k) each

    # ---- which (token row, expert) pairs does the reference gather use? ------
    # out[b, n, :] = sum_j vals[b, j] * FFN_{idx[b, j]}(x[b, j, :])   (all n)
    rows = (jnp.arange(B, dtype=jnp.int32)[:, None] * N
            + jnp.arange(k, dtype=jnp.int32)[None, :]).reshape(-1)    # (B*k,)
    experts = idx.reshape(-1).astype(jnp.int32)                       # (B*k,)

    # ---- lane-dense padding: D -> multiple of 128 -----------------------------
    Dp = _round_up(D, 128)
    xp = _pad_axis_to(x.reshape(B * N, 1, D), 2, Dp)         # (T, 1, Dp)
    W1p = _pad_axis_to(W1, 1, Dp)                            # (n_exp, Dp, H)
    W2p = _pad_axis_to(W2, 2, Dp)                            # (n_exp, H, Dp)
    b2p = _pad_axis_to(b2, 2, Dp)                            # (n_exp, 1, Dp)

    # ---- selected expert FFNs (hot path) in the Pallas kernel ----------------
    y = moe_selected_ffn(xp, rows, experts, W1p, b1, W2p, b2p)   # (B*k, 1, Dp)
    y = y[:, 0, :D].reshape(B, k, D)

    # ---- weighted sum over the k selections, broadcast over N ----------------
    combined = jnp.sum(vals[:, :, None].astype(y.dtype) * y, axis=1)  # (B, D)
    return jnp.broadcast_to(combined[:, None, :], (B, N, D))


def _reference_forward(x, params, k):
    """Pure-JAX reference mirroring the PyTorch module (dense, for checking)."""
    B, N, D = x.shape
    W1, b1, W2, b2, Wr, br = params
    scores = jax.nn.softmax((jnp.einsum("bnd,de->bne", x, Wr) + br).mean(1), axis=-1)
    vals, idx = jax.lax.top_k(scores, k)
    h = _gelu(jnp.einsum("bnd,edh->ebnh", x, W1) + b1[:, None, :, :])
    outs = jnp.einsum("ebnh,ehd->ebnd", h, W2) + b2[:, None, :, :]   # (n_exp,B,N,D)
    outs = jnp.transpose(outs, (1, 0, 2, 3))                          # (B,n_exp,N,D)
    b_idx = jnp.arange(B)[:, None]
    j_idx = jnp.arange(k)[None, :]
    sel = outs[b_idx, idx, j_idx, :]                                  # (B,k,D)
    combined = jnp.sum(vals[:, :, None] * sel, axis=1)
    return jnp.broadcast_to(combined[:, None, :], (B, N, D))


if __name__ == "__main__":
    # config: n_embd=32, k=2 ; n_exp=4 ; batch=2, seq=8
    B, N, D = 2, 8, 32
    H = 4 * D
    n_exp = 4
    k = 2

    key = jax.random.PRNGKey(0)
    ks = jax.random.split(key, 7)
    scale = 0.02
    W1 = scale * jax.random.normal(ks[0], (n_exp, D, H), jnp.float32)
    b1 = scale * jax.random.normal(ks[1], (n_exp, 1, H), jnp.float32)
    W2 = scale * jax.random.normal(ks[2], (n_exp, H, D), jnp.float32)
    b2 = scale * jax.random.normal(ks[3], (n_exp, 1, D), jnp.float32)
    Wr = scale * jax.random.normal(ks[4], (D, n_exp), jnp.float32)
    br = scale * jax.random.normal(ks[5], (n_exp,), jnp.float32)
    params = (W1, b1, W2, b2, Wr, br)

    x = jax.random.normal(ks[6], (B, N, D), jnp.float32)

    out = jax.block_until_ready(ffn_experts_forward(x, params, k))
    ref = jax.block_until_ready(_reference_forward(x, params, k))

    assert out.shape == (B, N, D)
    assert jnp.allclose(out, ref, atol=2e-3, rtol=2e-3), "mismatch vs reference"
    print("KERNEL_OK")
</pallas_src>

<mosaic_0001>
module attributes {stable_mosaic.version = 11 : i64} {
  func.func @_selected_ffn_kernel(%arg0: i32, %arg1: i32, %arg2: memref<4xi32, #tpu.memory_space<smem>>, %arg3: memref<4xi32, #tpu.memory_space<smem>>, %arg4: memref<1x1x128xf32, #tpu.memory_space<vmem>>, %arg5: memref<1x128x128xf32, #tpu.memory_space<vmem>>, %arg6: memref<1x1x128xf32, #tpu.memory_space<vmem>>, %arg7: memref<1x128x128xf32, #tpu.memory_space<vmem>>, %arg8: memref<1x1x128xf32, #tpu.memory_space<vmem>>, %arg9: memref<1x1x128xf32, #tpu.memory_space<vmem>>, %arg10: memref<1x128xf32, #tpu.memory_space<vmem>>) attributes {dimension_semantics = [#tpu.dimension_semantics<parallel>, #tpu.dimension_semantics<arbitrary>], iteration_bounds = array<i64: 4, 1>, scalar_prefetch = 2 : i64, scratch_operands = 1 : i64, tpu.core_type = #tpu.core_type<tc>, window_params = [{transform_indices = @transform_0, window_bounds = array<i64: 1, 1, 128>}, {transform_indices = @transform_1, window_bounds = array<i64: 1, 128, 128>}, {transform_indices = @transform_2, window_bounds = array<i64: 1, 1, 128>}, {transform_indices = @transform_3, window_bounds = array<i64: 1, 128, 128>}, {transform_indices = @transform_4, window_bounds = array<i64: 1, 1, 128>}, {transform_indices = @transform_5, window_bounds = array<i64: 1, 1, 128>}]} {
    %c0_i32 = arith.constant 0 : i32
    %0 = arith.cmpi eq, %arg1, %c0_i32 : i32
    %1 = arith.extui %0 : i1 to i32
    %c0_i32_0 = arith.constant 0 : i32
    %2 = arith.cmpi ne, %1, %c0_i32_0 : i32
    scf.if %2 {
      %cst_23 = arith.constant 0.000000e+00 : f32
      %33 = vector.broadcast %cst_23 : f32 to vector<1x128xf32>
      %c0_24 = arith.constant 0 : index
      %c0_25 = arith.constant 0 : index
      %34 = vector.load %arg10[%c0_24, %c0_25] : memref<1x128xf32, #tpu.memory_space<vmem>>, vector<1x128xf32>
      tpu.vector_store %arg10[%c0_24, %c0_25], %33 {strides = array<i32>} : memref<1x128xf32, #tpu.memory_space<vmem>>, vector<1x128xf32>,
    } else {
    }
    %c0 = arith.constant 0 : index
    %c0_1 = arith.constant 0 : index
    %c0_2 = arith.constant 0 : index
    %3 = vector.load %arg4[%c0, %c0_1, %c0_2] : memref<1x1x128xf32, #tpu.memory_space<vmem>>, vector<1x1x128xf32>
    %4 = vector.shape_cast %3 : vector<1x1x128xf32> to vector<1x128xf32>
    %c0_3 = arith.constant 0 : index
    %c0_4 = arith.constant 0 : index
    %c0_5 = arith.constant 0 : index
    %5 = vector.load %arg5[%c0_3, %c0_4, %c0_5] : memref<1x128x128xf32, #tpu.memory_space<vmem>>, vector<1x128x128xf32>
    %6 = vector.shape_cast %5 : vector<1x128x128xf32> to vector<128x128xf32>
    %cst = arith.constant dense<0.000000e+00> : vector<1x128xf32>
    %7 = tpu.matmul %4, %6, %cst {dimension_numbers = #tpu.dot_dimension_numbers<[1], [0], [0], [1], [0, 0, 1, 1], [], []>} : vector<1x128xf32>, vector<128x128xf32>, vector<1x128xf32> -> vector<1x128xf32>
    %c0_6 = arith.constant 0 : index
    %c0_7 = arith.constant 0 : index
    %c0_8 = arith.constant 0 : index
    %8 = vector.load %arg6[%c0_6, %c0_7, %c0_8] : memref<1x1x128xf32, #tpu.memory_space<vmem>>, vector<1x1x128xf32>
    %9 = vector.shape_cast %8 : vector<1x1x128xf32> to vector<1x128xf32>
    %10 = arith.addf %7, %9 : vector<1x128xf32>
    %cst_9 = arith.constant 5.000000e-01 : f32
    %11 = vector.broadcast %cst_9 : f32 to vector<1x128xf32>
    %12 = arith.mulf %11, %10 : vector<1x128xf32>
    %cst_10 = arith.constant 4.471500e-02 : f32
    %13 = vector.broadcast %cst_10 : f32 to vector<1x128xf32>
    %14 = arith.mulf %13, %10 : vector<1x128xf32>
    %15 = arith.mulf %14, %10 : vector<1x128xf32>
    %16 = arith.mulf %15, %10 : vector<1x128xf32>
    %17 = arith.addf %10, %16 : vector<1x128xf32>
    %cst_11 = arith.constant 0.797884583 : f32
    %18 = vector.broadcast %cst_11 : f32 to vector<1x128xf32>
    %19 = arith.mulf %18, %17 : vector<1x128xf32>
    %20 = math.tanh %19 : vector<1x128xf32>
    %cst_12 = arith.constant 1.000000e+00 : f32
    %21 = vector.broadcast %cst_12 : f32 to vector<1x128xf32>
    %22 = arith.addf %21, %20 : vector<1x128xf32>
    %23 = arith.mulf %12, %22 : vector<1x128xf32>
    %c0_13 = arith.constant 0 : index
    %c0_14 = arith.constant 0 : index
    %24 = vector.load %arg10[%c0_13, %c0_14] : memref<1x128xf32, #tpu.memory_space<vmem>>, vector<1x128xf32>
    %c0_15 = arith.constant 0 : index
    %c0_16 = arith.constant 0 : index
    %c0_17 = arith.constant 0 : index
    %25 = vector.load %arg7[%c0_15, %c0_16, %c0_17] : memref<1x128x128xf32, #tpu.memory_space<vmem>>, vector<1x128x128xf32>
    %26 = vector.shape_cast %25 : vector<1x128x128xf32> to vector<128x128xf32>
    %cst_18 = arith.constant dense<0.000000e+00> : vector<1x128xf32>
    %27 = tpu.matmul %23, %26, %cst_18 {dimension_numbers = #tpu.dot_dimension_numbers<[1], [0], [0], [1], [0, 0, 1, 1], [], []>} : vector<1x128xf32>, vector<128x128xf32>, vector<1x128xf32> -> vector<1x128xf32>
    %28 = arith.addf %24, %27 : vector<1x128xf32>
    %c0_19 = arith.constant 0 : index
    %c0_20 = arith.constant 0 : index
    %29 = vector.load %arg10[%c0_19, %c0_20] : memref<1x128xf32, #tpu.memory_space<vmem>>, vector<1x128xf32>
    tpu.vector_store %arg10[%c0_19, %c0_20], %28 {strides = array<i32>} : memref<1x128xf32, #tpu.memory_space<vmem>>, vector<1x128xf32>,
    %c0_i32_21 = arith.constant 0 : i32
    %30 = arith.cmpi eq, %arg1, %c0_i32_21 : i32
    %31 = arith.extui %30 : i1 to i32
    %c0_i32_22 = arith.constant 0 : i32
    %32 = arith.cmpi ne, %31, %c0_i32_22 : i32
    scf.if %32 {
      %c0_23 = arith.constant 0 : index
      %c0_24 = arith.constant 0 : index
      %33 = vector.load %arg10[%c0_23, %c0_24] : memref<1x128xf32, #tpu.memory_space<vmem>>, vector<1x128xf32>
      %c0_25 = arith.constant 0 : index
      %c0_26 = arith.constant 0 : index
      %c0_27 = arith.constant 0 : index
      %34 = vector.load %arg8[%c0_25, %c0_26, %c0_27] : memref<1x1x128xf32, #tpu.memory_space<vmem>>, vector<1x1x128xf32>
      %35 = vector.shape_cast %34 : vector<1x1x128xf32> to vector<1x128xf32>
      %36 = arith.addf %33, %35 : vector<1x128xf32>
      %c0_28 = arith.constant 0 : index
      %c0_29 = arith.constant 0 : index
      %c0_30 = arith.constant 0 : index
      %37 = vector.load %arg9[%c0_28, %c0_29, %c0_30] : memref<1x1x128xf32, #tpu.memory_space<vmem>>, vector<1x1x128xf32>
      %38 = vector.shape_cast %37 : vector<1x1x128xf32> to vector<1x128xf32>
      %39 = vector.shape_cast %36 : vector<1x128xf32> to vector<1x1x128xf32>
      tpu.vector_store %arg9[%c0_28, %c0_29, %c0_30], %39 {strides = array<i32>} : memref<1x1x128xf32, #tpu.memory_space<vmem>>, vector<1x1x128xf32>,
    } else {
    }
    return
  }
  func.func @transform_0(%arg0: i32, %arg1: i32, %arg2: memref<4xi32, #tpu.memory_space<smem>>, %arg3: memref<4xi32, #tpu.memory_space<smem>>) -> (i32, i32, i32) {
    %0 = arith.index_cast %arg0 : i32 to index
    %1 = memref.load %arg2[%0] : memref<4xi32, #tpu.memory_space<smem>>
    %c0_i32 = arith.constant 0 : i32
    %c0_i32_0 = arith.constant 0 : i32
    %c0_i32_1 = arith.constant 0 : i32
    return %1, %c0_i32, %c0_i32_0 : i32, i32, i32
  }
  func.func @transform_1(%arg0: i32, %arg1: i32, %arg2: memref<4xi32, #tpu.memory_space<smem>>, %arg3: memref<4xi32, #tpu.memory_space<smem>>) -> (i32, i32, i32) {
    %0 = arith.index_cast %arg0 : i32 to index
    %1 = memref.load %arg3[%0] : memref<4xi32, #tpu.memory_space<smem>>
    %c0_i32 = arith.constant 0 : i32
    %c0_i32_0 = arith.constant 0 : i32
    return %1, %c0_i32, %arg1 : i32, i32, i32
  }
  func.func @transform_2(%arg0: i32, %arg1: i32, %arg2: memref<4xi32, #tpu.memory_space<smem>>, %arg3: memref<4xi32, #tpu.memory_space<smem>>) -> (i32, i32, i32) {
    %0 = arith.index_cast %arg0 : i32 to index
    %1 = memref.load %arg3[%0] : memref<4xi32, #tpu.memory_space<smem>>
    %c0_i32 = arith.constant 0 : i32
    %c0_i32_0 = arith.constant 0 : i32
    return %1, %c0_i32, %arg1 : i32, i32, i32
  }
  func.func @transform_3(%arg0: i32, %arg1: i32, %arg2: memref<4xi32, #tpu.memory_space<smem>>, %arg3: memref<4xi32, #tpu.memory_space<smem>>) -> (i32, i32, i32) {
    %0 = arith.index_cast %arg0 : i32 to index
    %1 = memref.load %arg3[%0] : memref<4xi32, #tpu.memory_space<smem>>
    %c0_i32 = arith.constant 0 : i32
    %c0_i32_0 = arith.constant 0 : i32
    return %1, %arg1, %c0_i32 : i32, i32, i32
  }
  func.func @transform_4(%arg0: i32, %arg1: i32, %arg2: memref<4xi32, #tpu.memory_space<smem>>, %arg3: memref<4xi32, #tpu.memory_space<smem>>) -> (i32, i32, i32) {
    %0 = arith.index_cast %arg0 : i32 to index
    %1 = memref.load %arg3[%0] : memref<4xi32, #tpu.memory_space<smem>>
    %c0_i32 = arith.constant 0 : i32
    %c0_i32_0 = arith.constant 0 : i32
    %c0_i32_1 = arith.constant 0 : i32
    return %1, %c0_i32, %c0_i32_0 : i32, i32, i32
  }
  func.func @transform_5(%arg0: i32, %arg1: i32, %arg2: memref<4xi32, #tpu.memory_space<smem>>, %arg3: memref<4xi32, #tpu.memory_space<smem>>) -> (i32, i32, i32) {
    %c0_i32 = arith.constant 0 : i32
    %c0_i32_0 = arith.constant 0 : i32
    %c0_i32_1 = arith.constant 0 : i32
    return %arg0, %c0_i32, %c0_i32_0 : i32, i32, i32
  }
}

</mosaic_0001>

<llo_original>
// kernel: tpu_custom_call.1
$region0: #{tpu_custom_call.1}
  #allocation0 [shape = 'u32[]', space=smem, size = 0x4, offset = 0x4, fixed_abs, tag = 'smem constant byte address 0x4 - core index']
  #allocation1 [shape = 'u32[144,128]{1,0:T(1,128)}', space=vmem, size = 0x12000, scoped, tag = 'internal scratch']
  #allocation2 [shape = 'f32[1,128]{1,0:T(1,128)}', space=vmem, size = 0x200, scoped, tag = 'scratch operand']
  #allocation3 [shape = 's32[1]{0}', space=sflag, size = 0x4, scoped, tag = 'scoped memory for tpu_custom_call.1']
  #allocation4 [shape = 'u8[512]{0}', space=smem, size = 0x200, scoped, tag = 'prefetched SMEM operand 0']
  #allocation5 [shape = 'u8[512]{0}', space=smem, size = 0x200, scoped, tag = 'prefetched SMEM operand 1']
  %s0 = inlined_call_operand.hbm [shape: s32[4], index: 0, kind: input, shape index: {}]
  %s1 = inlined_call_operand.vmem [shape: s32[4], index: 1, kind: input, shape index: {}]
  %s2 = inlined_call_operand.hbm [shape: f32[16,1,128], index: 2, kind: input, shape index: {}]
  %s3 = inlined_call_operand.hbm [shape: f32[4,128,128], index: 3, kind: input, shape index: {}]
  %s4 = inlined_call_operand.vmem [shape: f32[4,1,128], index: 4, kind: input, shape index: {}]
  %s5 = inlined_call_operand.hbm [shape: f32[4,128,128], index: 5, kind: input, shape index: {}]
  %s6 = inlined_call_operand.vmem [shape: f32[4,1,128], index: 6, kind: input, shape index: {}]
  %s7 = inlined_call_operand.hbm [shape: f32[4,1,128], index: 7, kind: output, shape index: {}]
  %s8 = sld [smem:[#allocation0]]
  $region73: #{tpu_custom_call.1} parent=0
    _
  %s10 = ssub.s32 1, %s8
  %s11 = scalar_select 0, %s10, %s8
  %13 = dma.hbm_to_smem %s0, 16, [#allocation4], [#allocation3]
  %s14 = sshll.u32 %s1, 4
  %s15 = int_to_ptr.vmem [resolvable:$true] %s14
  %17 = dma.vmem_to_smem %s15, 16, [#allocation5], [#allocation3]
  %18 = dma.done [#allocation3], 32
  %19 = sfence
  $region1: #{tpu_custom_call.1} parent=0
    #allocation6 [shape = 'u8[1024]{0}', space=vmem, size = 0x400, scoped, tag = 'input window, operand 2']
    #allocation7 [shape = 's32[2]{0}', space=sflag, size = 0x8, scoped, tag = 'scoped memory for tpu_custom_call.1']
    #allocation8 [shape = 's32[2]{0}', space=sflag, size = 0x8, scoped, tag = 'scoped memory for tpu_custom_call.1']
    #allocation9 [shape = 'u8[131072]{0}', space=vmem, size = 0x20000, scoped, tag = 'input window, operand 3']
    #allocation10 [shape = 's32[2]{0}', space=sflag, size = 0x8, scoped, tag = 'scoped memory for tpu_custom_call.1']
    #allocation11 [shape = 'u8[131072]{0}', space=vmem, size = 0x20000, scoped, tag = 'input window, operand 5']
    #allocation12 [shape = 'u8[1024]{0}', space=vmem, size = 0x400, scoped, tag = 'output window, operand 0']
    %20 = vsyncpa [#allocation7], 0
    %s21 = scalar_lea.sflag [#allocation7], 1
    %22 = vsyncpa %s21, 0
    %23 = vsyncpa [#allocation10], 0
    %s24 = scalar_lea.sflag [#allocation10], 1
    %25 = vsyncpa %s24, 0
    %26 = vsyncpa [#allocation8], 0
    %s27 = scalar_lea.sflag [#allocation8], 1
    %28 = vsyncpa %s27, 0
    loop: start=0, step=1, limit=6
    $region2: #{tpu_custom_call.1} parent=1 // loop_pre_header
      _
    $region3: #{tpu_custom_call.1} parent=1 // loop_header
      %s30 = sphi 0, %s34
      %p31 = scmp.ge.s32.totalorder %s30, 6
      %s37 = sphi 0, %s49
      %s38 = sphi 0, %s45
      %s39 = sphi 0, %s37
      %s40 = sphi 0, %s38
      %s41 = sphi 0, %s39
      %s42 = sphi 0, %s40
      %s54 = sphi 0, %s56
      %s57 = sphi 0, %s54
      %s58 = sphi 0, %s57
      %s74 = sphi 0, %s58
      %s84 = sphi 0, %s86
      %s87 = sphi 0, %s84
      %s88 = sphi 0, %s87
      %s104 = sphi 0, %s88
      %s114 = sphi 0, %s116
      %s117 = sphi 0, %s114
      %s118 = sphi 0, %s117
      %s134 = sphi 0, %s118
      %s144 = sphi 0, %s146
      %s147 = sphi 0, %s144
      %s148 = sphi 0, %s147
      %s164 = sphi 0, %s148
      %s172 = sphi 0, %s174
      %s175 = sphi 0, %s172
      %s176 = sphi 0, %s175
      %s192 = sphi 0, %s176
      %s198 = sphi 0, %s200
      %s201 = sphi 0, %s198
      %s202 = sphi 0, %s201
      %s218 = sphi 0, %s202
    $region4: #{tpu_custom_call.1} parent=1 // loop_header_branch
      %33 = sbr.rel (%p31) target = $region8
    $region5: #{tpu_custom_call.1} parent=1 // loop_body
      %s35 = ssub.s32 %s30, 1
      %s36 = ssub.s32 %s30, 2
      %s43 = sadd.s32 1, %s38
      %p44 = scmp.ge.s32.totalorder %s43, 1
      %s45 = scalar_select %p44, 0, %s43
      %s46 = sadd.s32 1, %s37
      %s47 = scalar_select %p44, %s46, %s37
      %p48 = scmp.ge.s32.totalorder %s47, 4
      %s49 = scalar_select %p48, 0, %s47
      %s50 = sld [smem:[#allocation4 + %s37]]
      %s51 = sld [smem:[#allocation4 + %s49]]
      %s52 = ssub.s32 %s50, %s51
      %p53 = scmp.eq.s32.totalorder %s52, 0
      %s55 = sadd.s32 %s54, 1
      %s56 = scalar_select %p53, %s54, %s55
      %p59 = pneg %p53
      %p60 = scmp.eq.s32.totalorder %s30, 3
      %p61 = por %p59, %p60
      %p62 = scmp.ne.s32.totalorder %s54, %s57
      %p63 = scmp.eq.s32.totalorder %s30, 0
      %p64 = por %p62, %p63
      %p65 = scmp.ne.s32.totalorder %s54, %s57
      %p66 = scmp.eq.s32.totalorder %s35, 3
      %p67 = por %p65, %p66
      %p68 = scmp.ne.s32.totalorder %s57, %s58
      %p69 = scmp.eq.s32.totalorder %s35, 0
      %p70 = por %p68, %p69
      %p71 = scmp.ne.s32.totalorder %s57, %s58
      %p72 = scmp.eq.s32.totalorder %s36, 3
      %p73 = por %p71, %p72
      %p75 = scmp.ne.s32.totalorder %s58, %s74
      %p76 = scmp.eq.s32.totalorder %s36, 0
      %p77 = por %p75, %p76
      %s78 = sld [smem:[#allocation5 + %s37]]
      %s79 = sld [smem:[#allocation5 + %s49]]
      %s80 = ssub.s32 %s78, %s79
      %s81 = ssub.s32 %s38, %s45
      %s82 = sor.u32 %s80, %s81
      %p83 = scmp.eq.s32.totalorder %s82, 0
      %s85 = sadd.s32 %s84, 1
      %s86 = scalar_select %p83, %s84, %s85
      %p89 = pneg %p83
      %p90 = scmp.eq.s32.totalorder %s30, 3
      %p91 = por %p89, %p90
      %p92 = scmp.ne.s32.totalorder %s84, %s87
      %p93 = scmp.eq.s32.totalorder %s30, 0
      %p94 = por %p92, %p93
      %p95 = scmp.ne.s32.totalorder %s84, %s87
      %p96 = scmp.eq.s32.totalorder %s35, 3
      %p97 = por %p95, %p96
      %p98 = scmp.ne.s32.totalorder %s87, %s88
      %p99 = scmp.eq.s32.totalorder %s35, 0
      %p100 = por %p98, %p99
      %p101 = scmp.ne.s32.totalorder %s87, %s88
      %p102 = scmp.eq.s32.totalorder %s36, 3
      %p103 = por %p101, %p102
      %p105 = scmp.ne.s32.totalorder %s88, %s104
      %p106 = scmp.eq.s32.totalorder %s36, 0
      %p107 = por %p105, %p106
      %s108 = sld [smem:[#allocation5 + %s37]]
      %s109 = sld [smem:[#allocation5 + %s49]]
      %s110 = ssub.s32 %s108, %s109
      %s111 = ssub.s32 %s38, %s45
      %s112 = sor.u32 %s110, %s111
      %p113 = scmp.eq.s32.totalorder %s112, 0
      %s115 = sadd.s32 %s114, 1
      %s116 = scalar_select %p113, %s114, %s115
      %p119 = pneg %p113
      %p120 = scmp.eq.s32.totalorder %s30, 3
      %p121 = por %p119, %p120
      %p122 = scmp.ne.s32.totalorder %s114, %s117
      %p123 = scmp.eq.s32.totalorder %s30, 0
      %p124 = por %p122, %p123
      %p125 = scmp.ne.s32.totalorder %s114, %s117
      %p126 = scmp.eq.s32.totalorder %s35, 3
      %p127 = por %p125, %p126
      %p128 = scmp.ne.s32.totalorder %s117, %s118
      %p129 = scmp.eq.s32.totalorder %s35, 0
      %p130 = por %p128, %p129
      %p131 = scmp.ne.s32.totalorder %s117, %s118
      %p132 = scmp.eq.s32.totalorder %s36, 3
      %p133 = por %p131, %p132
      %p135 = scmp.ne.s32.totalorder %s118, %s134
      %p136 = scmp.eq.s32.totalorder %s36, 0
      %p137 = por %p135, %p136
      %s138 = sld [smem:[#allocation5 + %s37]]
      %s139 = sld [smem:[#allocation5 + %s49]]
      %s140 = ssub.s32 %s138, %s139
      %s141 = ssub.s32 %s38, %s45
      %s142 = sor.u32 %s140, %s141
      %p143 = scmp.eq.s32.totalorder %s142, 0
      %s145 = sadd.s32 %s144, 1
      %s146 = scalar_select %p143, %s144, %s145
      %p149 = pneg %p143
      %p150 = scmp.eq.s32.totalorder %s30, 3
      %p151 = por %p149, %p150
      %p152 = scmp.ne.s32.totalorder %s144, %s147
      %p153 = scmp.eq.s32.totalorder %s30, 0
      %p154 = por %p152, %p153
      %p155 = scmp.ne.s32.totalorder %s144, %s147
      %p156 = scmp.eq.s32.totalorder %s35, 3
      %p157 = por %p155, %p156
      %p158 = scmp.ne.s32.totalorder %s147, %s148
      %p159 = scmp.eq.s32.totalorder %s35, 0
      %p160 = por %p158, %p159
      %p161 = scmp.ne.s32.totalorder %s147, %s148
      %p162 = scmp.eq.s32.totalorder %s36, 3
      %p163 = por %p161, %p162
      %p165 = scmp.ne.s32.totalorder %s148, %s164
      %p166 = scmp.eq.s32.totalorder %s36, 0
      %p167 = por %p165, %p166
      %s168 = sld [smem:[#allocation5 + %s37]]
      %s169 = sld [smem:[#allocation5 + %s49]]
      %s170 = ssub.s32 %s168, %s169
      %p171 = scmp.eq.s32.totalorder %s170, 0
      %s173 = sadd.s32 %s172, 1
      %s174 = scalar_select %p171, %s172, %s173
      %p177 = pneg %p171
      %p178 = scmp.eq.s32.totalorder %s30, 3
      %p179 = por %p177, %p178
      %p180 = scmp.ne.s32.totalorder %s172, %s175
      %p181 = scmp.eq.s32.totalorder %s30, 0
      %p182 = por %p180, %p181
      %p183 = scmp.ne.s32.totalorder %s172, %s175
      %p184 = scmp.eq.s32.totalorder %s35, 3
      %p185 = por %p183, %p184
      %p186 = scmp.ne.s32.totalorder %s175, %s176
      %p187 = scmp.eq.s32.totalorder %s35, 0
      %p188 = por %p186, %p187
      %p189 = scmp.ne.s32.totalorder %s175, %s176
      %p190 = scmp.eq.s32.totalorder %s36, 3
      %p191 = por %p189, %p190
      %p193 = scmp.ne.s32.totalorder %s176, %s192
      %p194 = scmp.eq.s32.totalorder %s36, 0
      %p195 = por %p193, %p194
      %s196 = ssub.s32 %s37, %s49
      %p197 = scmp.eq.s32.totalorder %s196, 0
      %s199 = sadd.s32 %s198, 1
      %s200 = scalar_select %p197, %s198, %s199
      %p203 = pneg %p197
      %p204 = scmp.eq.s32.totalorder %s30, 3
      %p205 = por %p203, %p204
      %p206 = scmp.ne.s32.totalorder %s198, %s201
      %p207 = scmp.eq.s32.totalorder %s30, 0
      %p208 = por %p206, %p207
      %p209 = scmp.ne.s32.totalorder %s198, %s201
      %p210 = scmp.eq.s32.totalorder %s35, 3
      %p211 = por %p209, %p210
      %p212 = scmp.ne.s32.totalorder %s201, %s202
      %p213 = scmp.eq.s32.totalorder %s35, 0
      %p214 = por %p212, %p213
      %p215 = scmp.ne.s32.totalorder %s201, %s202
      %p216 = scmp.eq.s32.totalorder %s36, 3
      %p217 = por %p215, %p216
      %p219 = scmp.ne.s32.totalorder %s202, %s218
      %p220 = scmp.eq.s32.totalorder %s36, 0
      %p221 = por %p219, %p220
      %p222 = scmp.le.s32.totalorder 1, %s30
      %p223 = scmp.lt.s32.totalorder %s30, 5
      %p224 = pnand %p222, %p223
      %p225 = pneg %p224
      // Predicated region
      $region9: #{tpu_custom_call.1} parent=5 // pred_check
        _
      $region10: #{tpu_custom_call.1} parent=5 // pred_check_branch
        %227 = sbr.rel (%p224) target = $region12
      $region11: #{tpu_custom_call.1} parent=5 // pred_region
        %s228 = ssub.s32 %s30, 1
      $region12: #{tpu_custom_call.1} parent=5 // pred_fallthru
        _
      %p229 = scmp.lt.s32.totalorder %s30, 4
      // Predicated region
      $region13: #{tpu_custom_call.1} parent=5 // pred_check
        %p230 = pneg %p229
      $region14: #{tpu_custom_call.1} parent=5 // pred_check_branch
        %232 = sbr.rel (%p230) target = $region16
      $region15: #{tpu_custom_call.1} parent=5 // pred_region
        // Predicated region
        $region17: #{tpu_custom_call.1} parent=15 // pred_check
          %p233 = pneg %p64
        $region18: #{tpu_custom_call.1} parent=15 // pred_check_branch
          %235 = sbr.rel (%p233) target = $region20
        $region19: #{tpu_custom_call.1} parent=15 // pred_region
          %s236 = sand.u32 %s54, 1
          %s237 = scalar_lea.sflag [#allocation7], %s236
          %s238 = sand.u32 %s54, 1
          %s239 = scalar_lea.vmem [#allocation6], %s238
          %s240 = sld [smem:[#allocation4 + %s37]]
          %s242 = ssub.s32 16, 16
          %243 = vsyncadd %s237, %s242
          %s244 = smul.addr %s240, 16
          %s245 = scalar_lea.hbm %s2, %s244
          %s247 = sshll.u32 %s239, 4
          %s248 = int_to_ptr.vmem [resolvable:$true] %s247
          %250 = dma.hbm_to_vmem [thread:$0]  %s245, 16, %s248, %s237
        $region20: #{tpu_custom_call.1} parent=15 // pred_fallthru
          _
        // Predicated region
        $region21: #{tpu_custom_call.1} parent=15 // pred_check
          %p251 = pneg %p94
        $region22: #{tpu_custom_call.1} parent=15 // pred_check_branch
          %253 = sbr.rel (%p251) target = $region24
        $region23: #{tpu_custom_call.1} parent=15 // pred_region
          %s254 = sand.u32 %s30, 1
          %s255 = scalar_lea.sflag [#allocation10], %s254
          %s256 = sand.u32 %s84, 1
          %s257 = smul.addr %s256, 128
          %s258 = scalar_lea.vmem [#allocation9], %s257
          %s259 = sld [smem:[#allocation5 + %s37]]
          %s261 = ssub.s32 2048, 2048
          %262 = vsyncadd %s255, %s261
          %s263 = smul.addr %s259, 16
          %s264 = sadd.s32 %s38, %s263
          %s265 = smul.addr %s264, 128
          %s266 = scalar_lea.hbm %s3, %s265
          %s267 = sshll.u32 %s258, 4
          %s268 = int_to_ptr.vmem [resolvable:$true] %s267
          %273 = dma.hbm_to_vmem [thread:$0]  %s266, 2048, %s268, %s255, 128, 128, 8
        $region24: #{tpu_custom_call.1} parent=15 // pred_fallthru
          _
        // Predicated region
        $region25: #{tpu_custom_call.1} parent=15 // pred_check
          %p274 = pneg %p124
        $region26: #{tpu_custom_call.1} parent=15 // pred_check_branch
          %276 = sbr.rel (%p274) target = $region28
        $region27: #{tpu_custom_call.1} parent=15 // pred_region
          %s277 = sld [smem:[#allocation5 + %s37]]
          %p278 = scmp.lt.s32.totalorder %s277, 3
          %s279 = scalar_select %p278, %s277, 3
          %p280 = scmp.lt.s32.totalorder %s38, 0
          %s281 = scalar_select %p280, %s38, 0
          %s282 = sadd.s32 %s281, %s279
          %s283 = scalar_lea.vmem %s4, %s282
          %s284 = sld [smem:[#allocation5 + %s37]]
        $region28: #{tpu_custom_call.1} parent=15 // pred_fallthru
          _
        // Predicated region
        $region29: #{tpu_custom_call.1} parent=15 // pred_check
          %p285 = pneg %p154
        $region30: #{tpu_custom_call.1} parent=15 // pred_check_branch
          %287 = sbr.rel (%p285) target = $region32
        $region31: #{tpu_custom_call.1} parent=15 // pred_region
          %s288 = sand.u32 %s30, 1
          %s289 = scalar_lea.sflag [#allocation10], %s288
          %s290 = sand.u32 %s144, 1
          %s291 = smul.addr %s290, 128
          %s292 = scalar_lea.vmem [#allocation11], %s291
          %s293 = sld [smem:[#allocation5 + %s37]]
          %s294 = smul.u32 16, %s38
          %s296 = ssub.s32 2048, 2048
          %297 = vsyncadd %s289, %s296
          %s298 = smul.addr %s293, 16
          %s299 = sadd.s32 %s294, %s298
          %s300 = smul.addr %s299, 128
          %s301 = scalar_lea.hbm %s5, %s300
          %s302 = sshll.u32 %s292, 4
          %s303 = int_to_ptr.vmem [resolvable:$true] %s302
          %308 = dma.hbm_to_vmem [thread:$0]  %s301, 2048, %s303, %s289, 128, 128, 8
        $region32: #{tpu_custom_call.1} parent=15 // pred_fallthru
          _
        // Predicated region
        $region33: #{tpu_custom_call.1} parent=15 // pred_check
          %p309 = pneg %p182
        $region34: #{tpu_custom_call.1} parent=15 // pred_check_branch
          %311 = sbr.rel (%p309) target = $region36
        $region35: #{tpu_custom_call.1} parent=15 // pred_region
          %s312 = sld [smem:[#allocation5 + %s37]]
          %p313 = scmp.lt.s32.totalorder %s312, 3
          %s314 = scalar_select %p313, %s312, 3
          %s315 = scalar_lea.vmem %s6, %s314
          %s316 = sld [smem:[#allocation5 + %s37]]
        $region36: #{tpu_custom_call.1} parent=15 // pred_fallthru
          _
      $region16: #{tpu_custom_call.1} parent=5 // pred_fallthru
        _
      %p317 = scmp.le.s32.totalorder 1, %s30
      %p318 = scmp.lt.s32.totalorder %s30, 5
      %p319 = pnand %p317, %p318
      %p320 = pneg %p319
      // Predicated region
      $region37: #{tpu_custom_call.1} parent=5 // pred_check
        _
      $region38: #{tpu_custom_call.1} parent=5 // pred_check_branch
        %322 = sbr.rel (%p319) target = $region40
      $region39: #{tpu_custom_call.1} parent=5 // pred_region
        %s323 = ssub.s32 %s30, 1
        %s324 = sand.u32 %s57, 1
        %s325 = scalar_lea.sflag [#allocation7], %s324
        %s326 = sand.u32 %s57, 1
        %s327 = scalar_lea.vmem [#allocation6], %s326
        // Predicated region
        $region41: #{tpu_custom_call.1} parent=39 // pred_check
          %p328 = pneg %p70
        $region42: #{tpu_custom_call.1} parent=39 // pred_check_branch
          %330 = sbr.rel (%p328) target = $region44
        $region43: #{tpu_custom_call.1} parent=39 // pred_region
          %331 = dma.done %s325, 16
        $region44: #{tpu_custom_call.1} parent=39 // pred_fallthru
          _
        %s332 = sand.u32 %s35, 1
        %s333 = scalar_lea.sflag [#allocation10], %s332
        %s334 = sand.u32 %s87, 1
        %s335 = smul.addr %s334, 128
        %s336 = scalar_lea.vmem [#allocation9], %s335
        // Predicated region
        $region45: #{tpu_custom_call.1} parent=39 // pred_check
          %p337 = pneg %p100
        $region46: #{tpu_custom_call.1} parent=39 // pred_check_branch
          %339 = sbr.rel (%p337) target = $region48
        $region47: #{tpu_custom_call.1} parent=39 // pred_region
          %340 = dma.done %s333, 2048
        $region48: #{tpu_custom_call.1} parent=39 // pred_fallthru
          _
        %s341 = sand.u32 %s35, 1
        %s342 = scalar_lea.sflag [#allocation10], %s341
        %s343 = sand.u32 %s147, 1
        %s344 = smul.addr %s343, 128
        %s345 = scalar_lea.vmem [#allocation11], %s344
        // Predicated region
        $region49: #{tpu_custom_call.1} parent=39 // pred_check
          %p346 = pneg %p160
        $region50: #{tpu_custom_call.1} parent=39 // pred_check_branch
          %348 = sbr.rel (%p346) target = $region52
        $region51: #{tpu_custom_call.1} parent=39 // pred_region
          %349 = dma.done %s342, 2048
        $region52: #{tpu_custom_call.1} parent=39 // pred_fallthru
          _
        %s350 = sand.u32 %s57, 1
        %s351 = scalar_lea.sflag [#allocation7], %s350
        %s352 = sand.u32 %s57, 1
        %s353 = scalar_lea.vmem [#allocation6], %s352
        %p354 = pneg %p70
        %p355 = pneg %p67
        %s356 = sand.u32 %s35, 1
        %s357 = scalar_lea.sflag [#allocation10], %s356
        %s358 = sand.u32 %s87, 1
        %s359 = smul.addr %s358, 128
        %s360 = scalar_lea.vmem [#allocation9], %s359
        %p361 = pneg %p100
        %p362 = pneg %p97
        %s363 = sld [smem:[#allocation5 + %s39]]
        %p364 = scmp.lt.s32.totalorder %s363, 3
        %s365 = scalar_select %p364, %s363, 3
        %p366 = scmp.lt.s32.totalorder %s40, 0
        %s367 = scalar_select %p366, %s40, 0
        %s368 = sadd.s32 %s367, %s365
        %s369 = scalar_lea.vmem %s4, %s368
        %p370 = pneg %p130
        %p371 = pneg %p127
        %s372 = sand.u32 %s35, 1
        %s373 = scalar_lea.sflag [#allocation10], %s372
        %s374 = sand.u32 %s147, 1
        %s375 = smul.addr %s374, 128
        %s376 = scalar_lea.vmem [#allocation11], %s375
        %p377 = pneg %p160
        %p378 = pneg %p157
        %s379 = sld [smem:[#allocation5 + %s39]]
        %p380 = scmp.lt.s32.totalorder %s379, 3
        %s381 = scalar_select %p380, %s379, 3
        %s382 = scalar_lea.vmem %s6, %s381
        %p383 = pneg %p188
        %p384 = pneg %p185
        %p385 = pneg %p214
        %p386 = pneg %p211
        %s387 = sand.u32 %s201, 1
        %s388 = scalar_lea.sflag [#allocation8], %s387
        %s389 = sand.u32 %s201, 1
        %s390 = scalar_lea.vmem [#allocation12], %s389
        %s391 = sld [smem:[#allocation4 + %s39]]
        %s392 = sld [smem:[#allocation5 + %s39]]
        %s393 = sld [smem:[#allocation5 + %s39]]
        %p394 = scmp.lt.s32.totalorder %s393, 3
        %s395 = scalar_select %p394, %s393, 3
        %p396 = scmp.lt.s32.totalorder %s40, 0
        %s397 = scalar_select %p396, %s40, 0
        %s398 = sadd.s32 %s397, %s395
        %s399 = scalar_lea.vmem %s4, %s398
        %s400 = sld [smem:[#allocation5 + %s39]]
        %s401 = sld [smem:[#allocation5 + %s39]]
        %s402 = smul.u32 16, %s40
        %s403 = sld [smem:[#allocation5 + %s39]]
        %p404 = scmp.lt.s32.totalorder %s403, 3
        %s405 = scalar_select %p404, %s403, 3
        %s406 = scalar_lea.vmem %s6, %s405
        %s407 = sld [smem:[#allocation5 + %s39]]
        %p408 = scmp.eq.s32.totalorder %s40, 0
        // Predicated region
        $region53: #{tpu_custom_call.1} parent=39 // pred_check
          %p409 = pneg %p408
        $region54: #{tpu_custom_call.1} parent=39 // pred_check_branch
          %411 = sbr.rel (%p409) target = $region56
        $region55: #{tpu_custom_call.1} parent=39 // pred_region
          %412 = vst [vmem:[#allocation2] sm:$0x1] 0.0
        $region56: #{tpu_custom_call.1} parent=39 // pred_fallthru
          _
        %v413 = vld [vmem:[%s327] sm:$0x1]
        %v414 = vld [vmem:[%s336] sm:$0xff]
        %v415 = vld [vmem:[%s336 + $0x8] sm:$0xff]
        %v416 = vld [vmem:[%s336 + $0x10] sm:$0xff]
        %v417 = vld [vmem:[%s336 + $0x18] sm:$0xff]
        %v418 = vld [vmem:[%s336 + $0x20] sm:$0xff]
        %v419 = vld [vmem:[%s336 + $0x28] sm:$0xff]
        %v420 = vld [vmem:[%s336 + $0x30] sm:$0xff]
        %v421 = vld [vmem:[%s336 + $0x38] sm:$0xff]
        %v422 = vld [vmem:[%s336 + $0x40] sm:$0xff]
        %v423 = vld [vmem:[%s336 + $0x48] sm:$0xff]
        %v424 = vld [vmem:[%s336 + $0x50] sm:$0xff]
        %v425 = vld [vmem:[%s336 + $0x58] sm:$0xff]
        %v426 = vld [vmem:[%s336 + $0x60] sm:$0xff]
        %v427 = vld [vmem:[%s336 + $0x68] sm:$0xff]
        %v428 = vld [vmem:[%s336 + $0x70] sm:$0xff]
        %v429 = vld [vmem:[%s336 + $0x78] sm:$0xff]
        %v430 = vld [vmem:[%s399] sm:$0x1]
        %431 = vmatprep.subr.mxu0 0.0
        %432 = vmatpush1.msra.mxu0 %v414
        %433 = vmatprep.subr.mxu0 0.0
        %434 = vmatpush1.msra.mxu0 %v415
        %435 = vmatprep.subr.mxu0 0.0
        %436 = vmatpush1.msra.mxu0 %v416
        %437 = vmatprep.subr.mxu0 0.0
        %438 = vmatpush1.msra.mxu0 %v417
        %439 = vmatprep.subr.mxu0 0.0
        %440 = vmatpush1.msra.mxu0 %v418
        %441 = vmatprep.subr.mxu0 0.0
        %442 = vmatpush1.msra.mxu0 %v419
        %443 = vmatprep.subr.mxu0 0.0
        %444 = vmatpush1.msra.mxu0 %v420
        %445 = vmatprep.subr.mxu0 0.0
        %446 = vmatpush1.msra.mxu0 %v421
        %447 = vmatprep.subr.mxu0 0.0
        %448 = vmatpush1.msra.mxu0 %v422
        %449 = vmatprep.subr.mxu0 0.0
        %450 = vmatpush1.msra.mxu0 %v423
        %451 = vmatprep.subr.mxu0 0.0
        %452 = vmatpush1.msra.mxu0 %v424
        %453 = vmatprep.subr.mxu0 0.0
        %454 = vmatpush1.msra.mxu0 %v425
        %455 = vmatprep.subr.mxu0 0.0
        %456 = vmatpush1.msra.mxu0 %v426
        %457 = vmatprep.subr.mxu0 0.0
        %458 = vmatpush1.msra.mxu0 %v427
        %459 = vmatprep.subr.mxu0 0.0
        %460 = vmatpush1.msra.mxu0 %v428
        %461 = vmatprep.subr.mxu0 0.0
        %462 = vmatpush1.msra.mxu0 %v429
        %463 = vmatprep.subr.mxu0 0.0
        %464 = vmatpush1.msra.mxu0 0.0
        %465 = vmatprep.subr.mxu0 0.0
        %466 = vmatpush1.msra.mxu0 0.0
        %467 = vmatprep.subr.mxu0 0.0
        %468 = vmatpush1.msra.mxu0 0.0
        %469 = vmatprep.subr.mxu0 0.0
        %470 = vmatpush1.msra.mxu0 0.0
        %471 = vmatprep.subr.mxu0 0.0
        %472 = vmatpush1.msra.mxu0 0.0
        %473 = vmatprep.subr.mxu0 0.0
        %474 = vmatpush1.msra.mxu0 0.0
        %475 = vmatprep.subr.mxu0 0.0
        %476 = vmatpush1.msra.mxu0 0.0
        %477 = vmatprep.subr.mxu0 0.0
        %478 = vmatpush1.msra.mxu0 0.0
        %479 = vmatprep.subr.mxu0 0.0
        %480 = vmatpush1.msra.mxu0 0.0
        %481 = vmatprep.subr.mxu0 0.0
        %482 = vmatpush1.msra.mxu0 0.0
        %483 = vmatprep.subr.mxu0 0.0
        %484 = vmatpush1.msra.mxu0 0.0
        %485 = vmatprep.subr.mxu0 0.0
        %486 = vmatpush1.msra.mxu0 0.0
        %487 = vmatprep.subr.mxu0 0.0
        %488 = vmatpush1.msra.mxu0 0.0
        %489 = vmatprep.subr.mxu0 0.0
        %490 = vmatpush1.msra.mxu0 0.0
        %491 = vmatprep.subr.mxu0 0.0
        %492 = vmatpush1.msra.mxu0 0.0
        %493 = vmatprep.subr.mxu0 0.0
        %494 = vmatpush1.msra.mxu0 0.0
        %495 = vmatprep.mubr.f32.mxu0 0.0
        %496 = vmatmul.mubr.f32.gmra.mrb[0].mxu0 %v413
        %v497 = vpop.f32.mrb[0].mxu0
        %v498 = vadd.f32 %v430, %v497
        %v499 = vpop.f32.mrb[0].mxu0
        %500 = vdwg.mxu0
        %v501 = vmul.f32 %v498, 0.5
        %v502 = vmul.f32 %v498, 0.044715
        %v503 = vmul.f32 %v502, %v498
        %v504 = vmul.f32 %v503, %v498
        %v505 = vadd.f32 %v498, %v504
        %v506 = vmul.f32 %v505, 0.7978846
        %v507 = vtanh.pop %v506
        %v508 = vadd.f32 %v507, 1.0
        %v509 = vmul.f32 %v501, %v508
        %v510 = vld [vmem:[#allocation2] sm:$0x1]
        %v511 = vld [vmem:[%s345] sm:$0xff]
        %v512 = vld [vmem:[%s345 + $0x8] sm:$0xff]
        %v513 = vld [vmem:[%s345 + $0x10] sm:$0xff]
        %v514 = vld [vmem:[%s345 + $0x18] sm:$0xff]
        %v515 = vld [vmem:[%s345 + $0x20] sm:$0xff]
        %v516 = vld [vmem:[%s345 + $0x28] sm:$0xff]
        %v517 = vld [vmem:[%s345 + $0x30] sm:$0xff]
        %v518 = vld [vmem:[%s345 + $0x38] sm:$0xff]
        %v519 = vld [vmem:[%s345 + $0x40] sm:$0xff]
        %v520 = vld [vmem:[%s345 + $0x48] sm:$0xff]
        %v521 = vld [vmem:[%s345 + $0x50] sm:$0xff]
        %v522 = vld [vmem:[%s345 + $0x58] sm:$0xff]
        %v523 = vld [vmem:[%s345 + $0x60] sm:$0xff]
        %v524 = vld [vmem:[%s345 + $0x68] sm:$0xff]
        %v525 = vld [vmem:[%s345 + $0x70] sm:$0xff]
        %v526 = vld [vmem:[%s345 + $0x78] sm:$0xff]
        %527 = vmatprep.subr.mxu0 0.0
        %528 = vmatpush1.msra.mxu0 %v511
        %529 = vmatprep.subr.mxu0 0.0
        %530 = vmatpush1.msra.mxu0 %v512
        %531 = vmatprep.subr.mxu0 0.0
        %532 = vmatpush1.msra.mxu0 %v513
        %533 = vmatprep.subr.mxu0 0.0
        %534 = vmatpush1.msra.mxu0 %v514
        %535 = vmatprep.subr.mxu0 0.0
        %536 = vmatpush1.msra.mxu0 %v515
        %537 = vmatprep.subr.mxu0 0.0
        %538 = vmatpush1.msra.mxu0 %v516
        %539 = vmatprep.subr.mxu0 0.0
        %540 = vmatpush1.msra.mxu0 %v517
        %541 = vmatprep.subr.mxu0 0.0
        %542 = vmatpush1.msra.mxu0 %v518
        %543 = vmatprep.subr.mxu0 0.0
        %544 = vmatpush1.msra.mxu0 %v519
        %545 = vmatprep.subr.mxu0 0.0
        %546 = vmatpush1.msra.mxu0 %v520
        %547 = vmatprep.subr.mxu0 0.0
        %548 = vmatpush1.msra.mxu0 %v521
        %549 = vmatprep.subr.mxu0 0.0
        %550 = vmatpush1.msra.mxu0 %v522
        %551 = vmatprep.subr.mxu0 0.0
        %552 = vmatpush1.msra.mxu0 %v523
        %553 = vmatprep.subr.mxu0 0.0
        %554 = vmatpush1.msra.mxu0 %v524
        %555 = vmatprep.subr.mxu0 0.0
        %556 = vmatpush1.msra.mxu0 %v525
        %557 = vmatprep.subr.mxu0 0.0
        %558 = vmatpush1.msra.mxu0 %v526
        %559 = vmatprep.subr.mxu0 0.0
        %560 = vmatpush1.msra.mxu0 0.0
        %561 = vmatprep.subr.mxu0 0.0
        %562 = vmatpush1.msra.mxu0 0.0
        %563 = vmatprep.subr.mxu0 0.0
        %564 = vmatpush1.msra.mxu0 0.0
        %565 = vmatprep.subr.mxu0 0.0
        %566 = vmatpush1.msra.mxu0 0.0
        %567 = vmatprep.subr.mxu0 0.0
        %568 = vmatpush1.msra.mxu0 0.0
        %569 = vmatprep.subr.mxu0 0.0
        %570 = vmatpush1.msra.mxu0 0.0
        %571 = vmatprep.subr.mxu0 0.0
        %572 = vmatpush1.msra.mxu0 0.0
        %573 = vmatprep.subr.mxu0 0.0
        %574 = vmatpush1.msra.mxu0 0.0
        %575 = vmatprep.subr.mxu0 0.0
        %576 = vmatpush1.msra.mxu0 0.0
        %577 = vmatprep.subr.mxu0 0.0
        %578 = vmatpush1.msra.mxu0 0.0
        %579 = vmatprep.subr.mxu0 0.0
        %580 = vmatpush1.msra.mxu0 0.0
        %581 = vmatprep.subr.mxu0 0.0
        %582 = vmatpush1.msra.mxu0 0.0
        %583 = vmatprep.subr.mxu0 0.0
        %584 = vmatpush1.msra.mxu0 0.0
        %585 = vmatprep.subr.mxu0 0.0
        %586 = vmatpush1.msra.mxu0 0.0
        %587 = vmatprep.subr.mxu0 0.0
        %588 = vmatpush1.msra.mxu0 0.0
        %589 = vmatprep.subr.mxu0 0.0
        %590 = vmatpush1.msra.mxu0 0.0
        %591 = vmatprep.mubr.f32.mxu0 0.0
        %592 = vmatmul.mubr.f32.gmra.mrb[0].mxu0 %v509
        %v593 = vpop.f32.mrb[0].mxu0
        %v594 = vadd.f32 0.0, %v593
        %v595 = vpop.f32.mrb[0].mxu0
        %596 = vdwg.mxu0
        %v597 = vadd.f32 %v510, %v594
        %598 = vst [vmem:[#allocation2] sm:$0x1] %v597
        // Predicated region
        $region57: #{tpu_custom_call.1} parent=39 // pred_check
          %p599 = pneg %p408
        $region58: #{tpu_custom_call.1} parent=39 // pred_check_branch
          %601 = sbr.rel (%p599) target = $region60
        $region59: #{tpu_custom_call.1} parent=39 // pred_region
          %v602 = vld [vmem:[#allocation2] sm:$0x1]
          %v603 = vld [vmem:[%s406] sm:$0x1]
          %v604 = vadd.f32 %v602, %v603
          %605 = vst [vmem:[%s390] sm:$0x1] %v604
        $region60: #{tpu_custom_call.1} parent=39 // pred_fallthru
          _
        %s606 = sand.u32 %s201, 1
        %s607 = scalar_lea.sflag [#allocation8], %s606
        %s608 = sand.u32 %s201, 1
        %s609 = scalar_lea.vmem [#allocation12], %s608
        // Predicated region
        $region61: #{tpu_custom_call.1} parent=39 // pred_check
          %p610 = pneg %p211
        $region62: #{tpu_custom_call.1} parent=39 // pred_check_branch
          %612 = sbr.rel (%p610) target = $region64
        $region63: #{tpu_custom_call.1} parent=39 // pred_region
          %s614 = ssub.s32 16, 16
          %615 = vsyncadd %s607, %s614
          %s616 = smul.addr %s39, 16
          %s617 = scalar_lea.hbm %s7, %s616
          %s619 = sshll.u32 %s609, 4
          %s620 = int_to_ptr.vmem [resolvable:$true] %s619
          %622 = dma.vmem_to_hbm [thread:$0]  %s620, 16, %s617, %s607
        $region64: #{tpu_custom_call.1} parent=39 // pred_fallthru
          _
      $region40: #{tpu_custom_call.1} parent=5 // pred_fallthru
        _
      %p623 = scmp.le.s32.totalorder 2, %s30
      // Predicated region
      $region65: #{tpu_custom_call.1} parent=5 // pred_check
        %p624 = pneg %p623
      $region66: #{tpu_custom_call.1} parent=5 // pred_check_branch
        %626 = sbr.rel (%p624) target = $region68
      $region67: #{tpu_custom_call.1} parent=5 // pred_region
        %s627 = ssub.s32 %s30, 2
        // Predicated region
        $region69: #{tpu_custom_call.1} parent=67 // pred_check
          %p628 = pneg %p217
        $region70: #{tpu_custom_call.1} parent=67 // pred_check_branch
          %630 = sbr.rel (%p628) target = $region72
        $region71: #{tpu_custom_call.1} parent=67 // pred_region
          %s631 = sand.u32 %s202, 1
          %s632 = scalar_lea.sflag [#allocation8], %s631
          %s633 = sand.u32 %s202, 1
          %s634 = scalar_lea.vmem [#allocation12], %s633
          %635 = dma.done %s632, 16
        $region72: #{tpu_custom_call.1} parent=67 // pred_fallthru
          _
      $region68: #{tpu_custom_call.1} parent=5 // pred_fallthru
        _
    $region6: #{tpu_custom_call.1} parent=1 // loop_footer
      %s34 = sadd.s32 1, %s30
    $region7: #{tpu_custom_call.1} parent=1 // loop_footer_branch
      %29 = sbr.rel target = $region3
    $region8: #{tpu_custom_call.1} parent=1 // loop_exit
      _
    %636 = vsyncpa [#allocation7], 1
    %s637 = scalar_lea.sflag [#allocation7], 1
    %638 = vsyncpa %s637, 1
    %639 = vsyncpa [#allocation10], 1
    %s640 = scalar_lea.sflag [#allocation10], 1
    %641 = vsyncpa %s640, 1
    %642 = vsyncpa [#allocation8], 1
    %s643 = scalar_lea.sflag [#allocation8], 1
    %644 = vsyncpa %s643, 1

</llo_original>
